<compile_context>
chip_gen: v7x
topology: tpu7x:2x2x1
jax: 0.10.0
libtpu: 0.0.40
codegen_flags: <defaults>
</compile_context>

<pallas_src>
import functools
import math

import jax
import jax.numpy as jnp
from jax import lax
from jax.experimental import pallas as pl
from jax.experimental.pallas import tpu as pltpu


def _loss_kernel(x_ref, lab_ref, acc_ref, *, margin, n_rows, n_cols,
                 block_rows, chunk_rows, inner_steps):
    """Accumulates folded partial sums of the two-way sigmoid loss.

    acc_ref: (1, 4, 8, n_cols) f32 output block, resident across the inner
    (reduction) grid axis, one block per entry of the leading grid axis:
      [0,0] sum over positives       of sigmoid(x)          * sigmoid(margin - x)
      [0,1] sum over positives       of sigmoid(x + margin) * sigmoid(-x)
      [0,2] sum over all valid elems of sigmoid(x + margin) * sigmoid(-x)
      [0,3] count of positives
    """
    c = pl.program_id(0)          # "parallel" axis (megacore split / serializes)
    i = pl.program_id(1)          # reduction axis
    blk = c * inner_steps + i     # global (unclamped) row-block index

    @pl.when(i == 0)
    def _init():
        acc_ref[...] = jnp.zeros_like(acc_ref)

    exp_pm = math.exp(margin)     # compile-time scalars
    exp_nm = math.exp(-margin)
    n_chunks = block_rows // chunk_rows

    def fold(v):
        # (chunk_rows, C) -> (8, C): splits only the sublane-major dim (no
        # (8,128) tile boundary crossed), so this lowers to plain VPU adds.
        return v.reshape(chunk_rows // 8, 8, n_cols).sum(axis=0)

    def run_chunks(masked):
        def chunk(j, carry):
            r0 = pl.multiple_of(j * chunk_rows, 8)
            x = x_ref[pl.ds(r0, chunk_rows), :].astype(jnp.float32)
            x = jnp.maximum(x, -30.0)        # keep exp(-x) finite; |err| < 1e-13
            is_pos = lab_ref[pl.ds(r0, chunk_rows), :] == 1

            # 1 exp + 3 approx (EUP) reciprocals instead of 3 full sigmoids.
            e = jnp.exp(-x)
            sig_x = pl.reciprocal(1.0 + e, approx=True)            # sigmoid(x)
            sig_m = pl.reciprocal(1.0 + e * exp_pm, approx=True)   # sigmoid(x - margin)
            sig_p = pl.reciprocal(1.0 + e * exp_nm, approx=True)   # sigmoid(x + margin)
            pos = sig_x * (1.0 - sig_m)     # sigmoid(x) * sigmoid(-(x - margin))
            neg = sig_p * (1.0 - sig_x)     # sigmoid(x + margin) * sigmoid(-x)

            if masked:
                # Only the (at most one) partial / overflow block pays for this.
                row = lax.broadcasted_iota(jnp.int32, (chunk_rows, n_cols), 0)
                valid = blk * block_rows + r0 + row < n_rows
                is_pos_v = jnp.logical_and(is_pos, valid)
                neg_all = jnp.where(valid, neg, 0.0)   # NaN/Inf-safe discard
            else:
                is_pos_v = is_pos
                neg_all = neg

            acc_ref[0, 0] += fold(jnp.where(is_pos_v, pos, 0.0))
            acc_ref[0, 1] += fold(jnp.where(is_pos_v, neg, 0.0))
            acc_ref[0, 2] += fold(neg_all)
            acc_ref[0, 3] += fold(jnp.where(is_pos_v, 1.0, 0.0))
            return carry

        lax.fori_loop(0, n_chunks, chunk, 0)

    full_block = (blk + 1) * block_rows <= n_rows

    @pl.when(full_block)
    def _fast():
        run_chunks(masked=False)

    @pl.when(jnp.logical_not(full_block))
    def _edge():
        run_chunks(masked=True)


def two_way_sigmoid_loss(outputs, labels, prior, margin=1.0):
    """JAX/Pallas equivalent of TwoWaySigmoidLoss.forward (dist='softplus', tmpr=1)."""
    n_cols = outputs.shape[-1] if outputs.ndim >= 2 else outputs.shape[0]
    # Free (layout-preserving) collapse to 2-D; no pad / cast pass over HBM.
    out2d = outputs.reshape(-1, n_cols)
    lab2d = labels.reshape(-1, n_cols)
    n_rows = out2d.shape[0]
    n_total = n_rows * n_cols
    # TODO(synk): sub-32-bit label dtypes need block_rows % 32 == 0, and very
    # large single-row (1-D) inputs need a column-tiled variant of this kernel.

    lanes = ((n_cols + 127) // 128) * 128          # padded lane width
    # ~8 vregs per (chunk_rows, n_cols) f32 intermediate keeps live ranges
    # close to the 64-entry vreg file instead of round-tripping through VMEM.
    chunk_rows = max(8, ((8192 // lanes) // 8) * 8)
    # ~1M f32 elements (~4 MiB) per DMA'd block to amortise per-step overhead;
    # double-buffered scores+labels stay well under the 32 MiB VMEM budget.
    chunks_per_block = max(1, (1 << 20) // (chunk_rows * lanes))
    block_rows = chunk_rows * chunks_per_block
    block_rows = min(block_rows, -(-n_rows // chunk_rows) * chunk_rows)

    num_blocks = -(-n_rows // block_rows)
    # TODO(synk): derive from pltpu.get_tpu_info() / switch the leading axis to
    # pltpu.CORE_PARALLEL once cross-TC sharding of "parallel" is confirmed on
    # the target generation; on 1-TC chips the extra step serialises harmlessly.
    num_cores = 2
    inner_steps = -(-num_blocks // num_cores)

    def in_map(c, i):
        # Clamp: the (at most one) overflow step re-reads the last real block;
        # its contribution is fully masked out in-kernel.
        return (jnp.minimum(c * inner_steps + i, num_blocks - 1), 0)

    kernel = functools.partial(
        _loss_kernel, margin=float(margin), n_rows=n_rows, n_cols=n_cols,
        block_rows=block_rows, chunk_rows=chunk_rows, inner_steps=inner_steps)

    acc = pl.pallas_call(
        kernel,
        out_shape=jax.ShapeDtypeStruct((num_cores, 4, 8, n_cols), jnp.float32),
        grid=(num_cores, inner_steps),
        in_specs=[pl.BlockSpec((block_rows, n_cols), in_map),
                  pl.BlockSpec((block_rows, n_cols), in_map)],
        out_specs=pl.BlockSpec((1, 4, 8, n_cols), lambda c, i: (c, 0, 0, 0)),
        compiler_params=pltpu.CompilerParams(
            dimension_semantics=("parallel", "arbitrary"),
            vmem_limit_bytes=32 * 1024 * 1024),
    )(out2d, lab2d)

    # Final (tiny) cross-lane reduction + scalar combine in plain JAX.
    sums = acc.sum(axis=(0, 2, 3))                 # (4,)
    s_pp, s_pn, s_vn, cnt_p = sums[0], sums[1], sums[2], sums[3]
    cnt_u = jnp.float32(n_total) - cnt_p
    s_un = s_vn - s_pn

    c_p_plus = jnp.where(cnt_p > 0, s_pp / jnp.maximum(cnt_p, 1.0), 0.0)
    c_p_minus = jnp.where(cnt_p > 0, s_pn / jnp.maximum(cnt_p, 1.0), 0.0)
    c_u_minus = jnp.where(cnt_u > 0, s_un / jnp.maximum(cnt_u, 1.0), 0.0)

    # dist = softplus_loss(x1, x2) with beta(tmpr)=1 on scalars.
    d = c_u_minus - prior * c_p_minus
    return prior * c_p_plus + jax.nn.softplus(d) + jax.nn.softplus(-d)


def _reference(outputs, labels, prior, margin=1.0):
    """Plain-JAX reference reproducing the PyTorch forward."""
    o = outputs.reshape(-1).astype(jnp.float32)
    lab = labels.reshape(-1)
    is_p = lab == 1
    is_u = jnp.logical_not(is_p)
    pos = jax.nn.sigmoid(o) * jax.nn.sigmoid(-(o - margin))
    neg = jax.nn.sigmoid(o + margin) * jax.nn.sigmoid(-o)
    cnt_p = jnp.sum(is_p.astype(jnp.float32))
    cnt_u = jnp.sum(is_u.astype(jnp.float32))
    c_p_plus = jnp.where(cnt_p > 0,
                         jnp.sum(jnp.where(is_p, pos, 0.0)) / jnp.maximum(cnt_p, 1.0), 0.0)
    c_p_minus = jnp.where(cnt_p > 0,
                          jnp.sum(jnp.where(is_p, neg, 0.0)) / jnp.maximum(cnt_p, 1.0), 0.0)
    c_u_minus = jnp.where(cnt_u > 0,
                          jnp.sum(jnp.where(is_u, neg, 0.0)) / jnp.maximum(cnt_u, 1.0), 0.0)
    d = c_u_minus - prior * c_p_minus
    return prior * c_p_plus + jax.nn.softplus(d) + jax.nn.softplus(-d)


if __name__ == "__main__":
    key = jax.random.PRNGKey(0)
    k1, k2 = jax.random.split(key)

    # "prior" hyperparameter of the module (deterministic, set in-script).
    prior = 0.3
    margin = 1.0

    # Small synthetic batch: raw scores, labels in {0, 1} (1 = positive).
    outputs = 2.0 * jax.random.normal(k1, (4, 300), dtype=jnp.float32)
    labels = (jax.random.uniform(k2, (4, 300)) > 0.7).astype(jnp.int32)

    loss = two_way_sigmoid_loss(outputs, labels, prior, margin)
    loss = jax.block_until_ready(loss)

    ref = _reference(outputs, labels, prior, margin)
    # Approx (EUP) reciprocals carry ~2^-12 relative error per sigmoid term.
    assert jnp.abs(loss - ref) < 5e-3, (float(loss), float(ref))

    print("KERNEL_OK")
</pallas_src>

<mosaic_0001>
module attributes {stable_mosaic.version = 11 : i64} {
  func.func @_loss_kernel(%arg0: i32, %arg1: i32, %arg2: memref<16x300xf32, #tpu.memory_space<vmem>>, %arg3: memref<16x300xi32, #tpu.memory_space<vmem>>, %arg4: memref<1x4x8x300xf32, #tpu.memory_space<vmem>>) attributes {dimension_semantics = [#tpu.dimension_semantics<parallel>, #tpu.dimension_semantics<arbitrary>], iteration_bounds = array<i64: 2, 1>, scalar_prefetch = 0 : i64, scratch_operands = 0 : i64, tpu.core_type = #tpu.core_type<tc>, window_params = [{transform_indices = @transform_0, window_bounds = array<i64: 16, 300>}, {transform_indices = @transform_1, window_bounds = array<i64: 16, 300>}, {transform_indices = @transform_2, window_bounds = array<i64: 1, 4, 8, 300>}]} {
    %c1_i32 = arith.constant 1 : i32
    %0 = arith.muli %arg0, %c1_i32 : i32
    %1 = arith.addi %0, %arg1 : i32
    %c0_i32 = arith.constant 0 : i32
    %2 = arith.cmpi eq, %arg1, %c0_i32 : i32
    %3 = arith.extui %2 : i1 to i32
    %c0_i32_0 = arith.constant 0 : i32
    %4 = arith.cmpi ne, %3, %c0_i32_0 : i32
    scf.if %4 {
      %cst = arith.constant 0.000000e+00 : f32
      %13 = vector.broadcast %cst : f32 to vector<1x4x8x300xf32>
      %c0 = arith.constant 0 : index
      %c0_4 = arith.constant 0 : index
      %c0_5 = arith.constant 0 : index
      %c0_6 = arith.constant 0 : index
      %14 = vector.load %arg4[%c0, %c0_4, %c0_5, %c0_6] : memref<1x4x8x300xf32, #tpu.memory_space<vmem>>, vector<1x4x8x300xf32>
      tpu.vector_store %arg4[%c0, %c0_4, %c0_5, %c0_6], %13 {strides = array<i32>} : memref<1x4x8x300xf32, #tpu.memory_space<vmem>>, vector<1x4x8x300xf32>,
    } else {
    }
    %c1_i32_1 = arith.constant 1 : i32
    %5 = arith.addi %1, %c1_i32_1 : i32
    %c16_i32 = arith.constant 16 : i32
    %6 = arith.muli %5, %c16_i32 : i32
    %c4_i32 = arith.constant 4 : i32
    %7 = arith.cmpi sle, %6, %c4_i32 : i32
    %8 = arith.extui %7 : i1 to i32
    %c0_i32_2 = arith.constant 0 : i32
    %9 = arith.cmpi ne, %8, %c0_i32_2 : i32
    scf.if %9 {
      %c0_i32_4 = arith.constant 0 : i32
      %c16_i32_5 = arith.constant 16 : i32
      %13 = arith.muli %c0_i32_4, %c16_i32_5 : i32
      %14 = tpu.assume_multiple %13, 8 : i32
      %15 = arith.index_cast %14 : i32 to index
      %c0 = arith.constant 0 : index
      %16 = vector.load %arg2[%15, %c0] : memref<16x300xf32, #tpu.memory_space<vmem>>, vector<16x300xf32>
      %cst = arith.constant -3.000000e+01 : f32
      %17 = vector.broadcast %cst : f32 to vector<16x300xf32>
      %18 = arith.maximumf %16, %17 : vector<16x300xf32>
      %19 = arith.index_cast %14 : i32 to index
      %c0_6 = arith.constant 0 : index
      %20 = vector.load %arg3[%19, %c0_6] : memref<16x300xi32, #tpu.memory_space<vmem>>, vector<16x300xi32>
      %c1_i32_7 = arith.constant 1 : i32
      %21 = vector.broadcast %c1_i32_7 : i32 to vector<16x300xi32>
      %22 = arith.cmpi eq, %20, %21 : vector<16x300xi32>
      %cst_8 = arith.constant 0.000000e+00 : f32
      %23 = vector.broadcast %cst_8 : f32 to vector<16x300xf32>
      %24 = arith.subf %23, %18 : vector<16x300xf32>
      %25 = math.exp %24 : vector<16x300xf32>
      %cst_9 = arith.constant 1.000000e+00 : f32
      %26 = vector.broadcast %cst_9 : f32 to vector<16x300xf32>
      %27 = arith.addf %26, %25 : vector<16x300xf32>
      %28 = tpu.reciprocal %27 {approx = true} : vector<16x300xf32> -> vector<16x300xf32>
      %cst_10 = arith.constant 2.71828175 : f32
      %29 = vector.broadcast %cst_10 : f32 to vector<16x300xf32>
      %30 = arith.mulf %25, %29 : vector<16x300xf32>
      %cst_11 = arith.constant 1.000000e+00 : f32
      %31 = vector.broadcast %cst_11 : f32 to vector<16x300xf32>
      %32 = arith.addf %31, %30 : vector<16x300xf32>
      %33 = tpu.reciprocal %32 {approx = true} : vector<16x300xf32> -> vector<16x300xf32>
      %cst_12 = arith.constant 0.36787945 : f32
      %34 = vector.broadcast %cst_12 : f32 to vector<16x300xf32>
      %35 = arith.mulf %25, %34 : vector<16x300xf32>
      %cst_13 = arith.constant 1.000000e+00 : f32
      %36 = vector.broadcast %cst_13 : f32 to vector<16x300xf32>
      %37 = arith.addf %36, %35 : vector<16x300xf32>
      %38 = tpu.reciprocal %37 {approx = true} : vector<16x300xf32> -> vector<16x300xf32>
      %cst_14 = arith.constant 1.000000e+00 : f32
      %39 = vector.broadcast %cst_14 : f32 to vector<16x300xf32>
      %40 = arith.subf %39, %33 : vector<16x300xf32>
      %41 = arith.mulf %28, %40 : vector<16x300xf32>
      %cst_15 = arith.constant 1.000000e+00 : f32
      %42 = vector.broadcast %cst_15 : f32 to vector<16x300xf32>
      %43 = arith.subf %42, %28 : vector<16x300xf32>
      %44 = arith.mulf %38, %43 : vector<16x300xf32>
      %c0_16 = arith.constant 0 : index
      %c0_17 = arith.constant 0 : index
      %c0_18 = arith.constant 0 : index
      %c0_19 = arith.constant 0 : index
      %45 = vector.load %arg4[%c0_16, %c0_17, %c0_18, %c0_19] : memref<1x4x8x300xf32, #tpu.memory_space<vmem>>, vector<1x1x8x300xf32>
      %46 = vector.shape_cast %45 : vector<1x1x8x300xf32> to vector<8x300xf32>
      %cst_20 = arith.constant 0.000000e+00 : f32
      %47 = vector.broadcast %cst_20 : f32 to vector<16x300xf32>
      %48 = arith.select %22, %41, %47 : vector<16x300xi1>, vector<16x300xf32>
      %49 = vector.shape_cast %48 : vector<16x300xf32> to vector<2x8x300xf32>
      %cst_21 = arith.constant dense<0.000000e+00> : vector<8x300xf32>
      %50 = vector.multi_reduction <add>, %49, %cst_21 [0] : vector<2x8x300xf32> to vector<8x300xf32>
      %51 = arith.addf %46, %50 : vector<8x300xf32>
      %c0_22 = arith.constant 0 : index
      %c0_23 = arith.constant 0 : index
      %c0_24 = arith.constant 0 : index
      %c0_25 = arith.constant 0 : index
      %52 = vector.load %arg4[%c0_22, %c0_23, %c0_24, %c0_25] : memref<1x4x8x300xf32, #tpu.memory_space<vmem>>, vector<1x1x8x300xf32>
      %53 = vector.shape_cast %52 : vector<1x1x8x300xf32> to vector<8x300xf32>
      %54 = vector.shape_cast %51 : vector<8x300xf32> to vector<1x1x8x300xf32>
      tpu.vector_store %arg4[%c0_22, %c0_23, %c0_24, %c0_25], %54 {strides = array<i32>} : memref<1x4x8x300xf32, #tpu.memory_space<vmem>>, vector<1x1x8x300xf32>,
      %c0_26 = arith.constant 0 : index
      %c1 = arith.constant 1 : index
      %c0_27 = arith.constant 0 : index
      %c0_28 = arith.constant 0 : index
      %55 = vector.load %arg4[%c0_26, %c1, %c0_27, %c0_28] : memref<1x4x8x300xf32, #tpu.memory_space<vmem>>, vector<1x1x8x300xf32>
      %56 = vector.shape_cast %55 : vector<1x1x8x300xf32> to vector<8x300xf32>
      %cst_29 = arith.constant 0.000000e+00 : f32
      %57 = vector.broadcast %cst_29 : f32 to vector<16x300xf32>
      %58 = arith.select %22, %44, %57 : vector<16x300xi1>, vector<16x300xf32>
      %59 = vector.shape_cast %58 : vector<16x300xf32> to vector<2x8x300xf32>
      %cst_30 = arith.constant dense<0.000000e+00> : vector<8x300xf32>
      %60 = vector.multi_reduction <add>, %59, %cst_30 [0] : vector<2x8x300xf32> to vector<8x300xf32>
      %61 = arith.addf %56, %60 : vector<8x300xf32>
      %c0_31 = arith.constant 0 : index
      %c1_32 = arith.constant 1 : index
      %c0_33 = arith.constant 0 : index
      %c0_34 = arith.constant 0 : index
      %62 = vector.load %arg4[%c0_31, %c1_32, %c0_33, %c0_34] : memref<1x4x8x300xf32, #tpu.memory_space<vmem>>, vector<1x1x8x300xf32>
      %63 = vector.shape_cast %62 : vector<1x1x8x300xf32> to vector<8x300xf32>
      %64 = vector.shape_cast %61 : vector<8x300xf32> to vector<1x1x8x300xf32>
      tpu.vector_store %arg4[%c0_31, %c1_32, %c0_33, %c0_34], %64 {strides = array<i32>} : memref<1x4x8x300xf32, #tpu.memory_space<vmem>>, vector<1x1x8x300xf32>,
      %c0_35 = arith.constant 0 : index
      %c2 = arith.constant 2 : index
      %c0_36 = arith.constant 0 : index
      %c0_37 = arith.constant 0 : index
      %65 = vector.load %arg4[%c0_35, %c2, %c0_36, %c0_37] : memref<1x4x8x300xf32, #tpu.memory_space<vmem>>, vector<1x1x8x300xf32>
      %66 = vector.shape_cast %65 : vector<1x1x8x300xf32> to vector<8x300xf32>
      %67 = vector.shape_cast %44 : vector<16x300xf32> to vector<2x8x300xf32>
      %cst_38 = arith.constant dense<0.000000e+00> : vector<8x300xf32>
      %68 = vector.multi_reduction <add>, %67, %cst_38 [0] : vector<2x8x300xf32> to vector<8x300xf32>
      %69 = arith.addf %66, %68 : vector<8x300xf32>
      %c0_39 = arith.constant 0 : index
      %c2_40 = arith.constant 2 : index
      %c0_41 = arith.constant 0 : index
      %c0_42 = arith.constant 0 : index
      %70 = vector.load %arg4[%c0_39, %c2_40, %c0_41, %c0_42] : memref<1x4x8x300xf32, #tpu.memory_space<vmem>>, vector<1x1x8x300xf32>
      %71 = vector.shape_cast %70 : vector<1x1x8x300xf32> to vector<8x300xf32>
      %72 = vector.shape_cast %69 : vector<8x300xf32> to vector<1x1x8x300xf32>
      tpu.vector_store %arg4[%c0_39, %c2_40, %c0_41, %c0_42], %72 {strides = array<i32>} : memref<1x4x8x300xf32, #tpu.memory_space<vmem>>, vector<1x1x8x300xf32>,
      %c0_43 = arith.constant 0 : index
      %c3 = arith.constant 3 : index
      %c0_44 = arith.constant 0 : index
      %c0_45 = arith.constant 0 : index
      %73 = vector.load %arg4[%c0_43, %c3, %c0_44, %c0_45] : memref<1x4x8x300xf32, #tpu.memory_space<vmem>>, vector<1x1x8x300xf32>
      %74 = vector.shape_cast %73 : vector<1x1x8x300xf32> to vector<8x300xf32>
      %cst_46 = arith.constant 1.000000e+00 : f32
      %cst_47 = arith.constant 0.000000e+00 : f32
      %75 = vector.broadcast %cst_46 : f32 to vector<16x300xf32>
      %76 = vector.broadcast %cst_47 : f32 to vector<16x300xf32>
      %77 = arith.select %22, %75, %76 : vector<16x300xi1>, vector<16x300xf32>
      %78 = vector.shape_cast %77 : vector<16x300xf32> to vector<2x8x300xf32>
      %cst_48 = arith.constant dense<0.000000e+00> : vector<8x300xf32>
      %79 = vector.multi_reduction <add>, %78, %cst_48 [0] : vector<2x8x300xf32> to vector<8x300xf32>
      %80 = arith.addf %74, %79 : vector<8x300xf32>
      %c0_49 = arith.constant 0 : index
      %c3_50 = arith.constant 3 : index
      %c0_51 = arith.constant 0 : index
      %c0_52 = arith.constant 0 : index
      %81 = vector.load %arg4[%c0_49, %c3_50, %c0_51, %c0_52] : memref<1x4x8x300xf32, #tpu.memory_space<vmem>>, vector<1x1x8x300xf32>
      %82 = vector.shape_cast %81 : vector<1x1x8x300xf32> to vector<8x300xf32>
      %83 = vector.shape_cast %80 : vector<8x300xf32> to vector<1x1x8x300xf32>
      tpu.vector_store %arg4[%c0_49, %c3_50, %c0_51, %c0_52], %83 {strides = array<i32>} : memref<1x4x8x300xf32, #tpu.memory_space<vmem>>, vector<1x1x8x300xf32>,
      %c1_i32_53 = arith.constant 1 : i32
    } else {
    }
    %true = arith.constant true
    %10 = arith.xori %7, %true : i1
    %11 = arith.extui %10 : i1 to i32
    %c0_i32_3 = arith.constant 0 : i32
    %12 = arith.cmpi ne, %11, %c0_i32_3 : i32
    scf.if %12 {
      %c0_i32_4 = arith.constant 0 : i32
      %c16_i32_5 = arith.constant 16 : i32
      %13 = arith.muli %c0_i32_4, %c16_i32_5 : i32
      %14 = tpu.assume_multiple %13, 8 : i32
      %15 = arith.index_cast %14 : i32 to index
      %c0 = arith.constant 0 : index
      %16 = vector.load %arg2[%15, %c0] : memref<16x300xf32, #tpu.memory_space<vmem>>, vector<16x300xf32>
      %cst = arith.constant -3.000000e+01 : f32
      %17 = vector.broadcast %cst : f32 to vector<16x300xf32>
      %18 = arith.maximumf %16, %17 : vector<16x300xf32>
      %19 = arith.index_cast %14 : i32 to index
      %c0_6 = arith.constant 0 : index
      %20 = vector.load %arg3[%19, %c0_6] : memref<16x300xi32, #tpu.memory_space<vmem>>, vector<16x300xi32>
      %c1_i32_7 = arith.constant 1 : i32
      %21 = vector.broadcast %c1_i32_7 : i32 to vector<16x300xi32>
      %22 = arith.cmpi eq, %20, %21 : vector<16x300xi32>
      %cst_8 = arith.constant 0.000000e+00 : f32
      %23 = vector.broadcast %cst_8 : f32 to vector<16x300xf32>
      %24 = arith.subf %23, %18 : vector<16x300xf32>
      %25 = math.exp %24 : vector<16x300xf32>
      %cst_9 = arith.constant 1.000000e+00 : f32
      %26 = vector.broadcast %cst_9 : f32 to vector<16x300xf32>
      %27 = arith.addf %26, %25 : vector<16x300xf32>
      %28 = tpu.reciprocal %27 {approx = true} : vector<16x300xf32> -> vector<16x300xf32>
      %cst_10 = arith.constant 2.71828175 : f32
      %29 = vector.broadcast %cst_10 : f32 to vector<16x300xf32>
      %30 = arith.mulf %25, %29 : vector<16x300xf32>
      %cst_11 = arith.constant 1.000000e+00 : f32
      %31 = vector.broadcast %cst_11 : f32 to vector<16x300xf32>
      %32 = arith.addf %31, %30 : vector<16x300xf32>
      %33 = tpu.reciprocal %32 {approx = true} : vector<16x300xf32> -> vector<16x300xf32>
      %cst_12 = arith.constant 0.36787945 : f32
      %34 = vector.broadcast %cst_12 : f32 to vector<16x300xf32>
      %35 = arith.mulf %25, %34 : vector<16x300xf32>
      %cst_13 = arith.constant 1.000000e+00 : f32
      %36 = vector.broadcast %cst_13 : f32 to vector<16x300xf32>
      %37 = arith.addf %36, %35 : vector<16x300xf32>
      %38 = tpu.reciprocal %37 {approx = true} : vector<16x300xf32> -> vector<16x300xf32>
      %cst_14 = arith.constant 1.000000e+00 : f32
      %39 = vector.broadcast %cst_14 : f32 to vector<16x300xf32>
      %40 = arith.subf %39, %33 : vector<16x300xf32>
      %41 = arith.mulf %28, %40 : vector<16x300xf32>
      %cst_15 = arith.constant 1.000000e+00 : f32
      %42 = vector.broadcast %cst_15 : f32 to vector<16x300xf32>
      %43 = arith.subf %42, %28 : vector<16x300xf32>
      %44 = arith.mulf %38, %43 : vector<16x300xf32>
      %45 = tpu.iota {dimensions = array<i32: 0>} : vector<16x300xi32>
      %c16_i32_16 = arith.constant 16 : i32
      %46 = arith.muli %1, %c16_i32_16 : i32
      %47 = arith.addi %46, %14 : i32
      %48 = vector.broadcast %47 : i32 to vector<16x300xi32>
      %49 = arith.addi %48, %45 : vector<16x300xi32>
      %c4_i32_17 = arith.constant 4 : i32
      %50 = vector.broadcast %c4_i32_17 : i32 to vector<16x300xi32>
      %51 = arith.cmpi slt, %49, %50 : vector<16x300xi32>
      %52 = arith.andi %22, %51 : vector<16x300xi1>
      %cst_18 = arith.constant 0.000000e+00 : f32
      %53 = vector.broadcast %cst_18 : f32 to vector<16x300xf32>
      %54 = arith.select %51, %44, %53 : vector<16x300xi1>, vector<16x300xf32>
      %c0_19 = arith.constant 0 : index
      %c0_20 = arith.constant 0 : index
      %c0_21 = arith.constant 0 : index
      %c0_22 = arith.constant 0 : index
      %55 = vector.load %arg4[%c0_19, %c0_20, %c0_21, %c0_22] : memref<1x4x8x300xf32, #tpu.memory_space<vmem>>, vector<1x1x8x300xf32>
      %56 = vector.shape_cast %55 : vector<1x1x8x300xf32> to vector<8x300xf32>
      %cst_23 = arith.constant 0.000000e+00 : f32
      %57 = vector.broadcast %cst_23 : f32 to vector<16x300xf32>
      %58 = arith.select %52, %41, %57 : vector<16x300xi1>, vector<16x300xf32>
      %59 = vector.shape_cast %58 : vector<16x300xf32> to vector<2x8x300xf32>
      %cst_24 = arith.constant dense<0.000000e+00> : vector<8x300xf32>
      %60 = vector.multi_reduction <add>, %59, %cst_24 [0] : vector<2x8x300xf32> to vector<8x300xf32>
      %61 = arith.addf %56, %60 : vector<8x300xf32>
      %c0_25 = arith.constant 0 : index
      %c0_26 = arith.constant 0 : index
      %c0_27 = arith.constant 0 : index
      %c0_28 = arith.constant 0 : index
      %62 = vector.load %arg4[%c0_25, %c0_26, %c0_27, %c0_28] : memref<1x4x8x300xf32, #tpu.memory_space<vmem>>, vector<1x1x8x300xf32>
      %63 = vector.shape_cast %62 : vector<1x1x8x300xf32> to vector<8x300xf32>
      %64 = vector.shape_cast %61 : vector<8x300xf32> to vector<1x1x8x300xf32>
      tpu.vector_store %arg4[%c0_25, %c0_26, %c0_27, %c0_28], %64 {strides = array<i32>} : memref<1x4x8x300xf32, #tpu.memory_space<vmem>>, vector<1x1x8x300xf32>,
      %c0_29 = arith.constant 0 : index
      %c1 = arith.constant 1 : index
      %c0_30 = arith.constant 0 : index
      %c0_31 = arith.constant 0 : index
      %65 = vector.load %arg4[%c0_29, %c1, %c0_30, %c0_31] : memref<1x4x8x300xf32, #tpu.memory_space<vmem>>, vector<1x1x8x300xf32>
      %66 = vector.shape_cast %65 : vector<1x1x8x300xf32> to vector<8x300xf32>
      %cst_32 = arith.constant 0.000000e+00 : f32
      %67 = vector.broadcast %cst_32 : f32 to vector<16x300xf32>
      %68 = arith.select %52, %44, %67 : vector<16x300xi1>, vector<16x300xf32>
      %69 = vector.shape_cast %68 : vector<16x300xf32> to vector<2x8x300xf32>
      %cst_33 = arith.constant dense<0.000000e+00> : vector<8x300xf32>
      %70 = vector.multi_reduction <add>, %69, %cst_33 [0] : vector<2x8x300xf32> to vector<8x300xf32>
      %71 = arith.addf %66, %70 : vector<8x300xf32>
      %c0_34 = arith.constant 0 : index
      %c1_35 = arith.constant 1 : index
      %c0_36 = arith.constant 0 : index
      %c0_37 = arith.constant 0 : index
      %72 = vector.load %arg4[%c0_34, %c1_35, %c0_36, %c0_37] : memref<1x4x8x300xf32, #tpu.memory_space<vmem>>, vector<1x1x8x300xf32>
      %73 = vector.shape_cast %72 : vector<1x1x8x300xf32> to vector<8x300xf32>
      %74 = vector.shape_cast %71 : vector<8x300xf32> to vector<1x1x8x300xf32>
      tpu.vector_store %arg4[%c0_34, %c1_35, %c0_36, %c0_37], %74 {strides = array<i32>} : memref<1x4x8x300xf32, #tpu.memory_space<vmem>>, vector<1x1x8x300xf32>,
      %c0_38 = arith.constant 0 : index
      %c2 = arith.constant 2 : index
      %c0_39 = arith.constant 0 : index
      %c0_40 = arith.constant 0 : index
      %75 = vector.load %arg4[%c0_38, %c2, %c0_39, %c0_40] : memref<1x4x8x300xf32, #tpu.memory_space<vmem>>, vector<1x1x8x300xf32>
      %76 = vector.shape_cast %75 : vector<1x1x8x300xf32> to vector<8x300xf32>
      %77 = vector.shape_cast %54 : vector<16x300xf32> to vector<2x8x300xf32>
      %cst_41 = arith.constant dense<0.000000e+00> : vector<8x300xf32>
      %78 = vector.multi_reduction <add>, %77, %cst_41 [0] : vector<2x8x300xf32> to vector<8x300xf32>
      %79 = arith.addf %76, %78 : vector<8x300xf32>
      %c0_42 = arith.constant 0 : index
      %c2_43 = arith.constant 2 : index
      %c0_44 = arith.constant 0 : index
      %c0_45 = arith.constant 0 : index
      %80 = vector.load %arg4[%c0_42, %c2_43, %c0_44, %c0_45] : memref<1x4x8x300xf32, #tpu.memory_space<vmem>>, vector<1x1x8x300xf32>
      %81 = vector.shape_cast %80 : vector<1x1x8x300xf32> to vector<8x300xf32>
      %82 = vector.shape_cast %79 : vector<8x300xf32> to vector<1x1x8x300xf32>
      tpu.vector_store %arg4[%c0_42, %c2_43, %c0_44, %c0_45], %82 {strides = array<i32>} : memref<1x4x8x300xf32, #tpu.memory_space<vmem>>, vector<1x1x8x300xf32>,
      %c0_46 = arith.constant 0 : index
      %c3 = arith.constant 3 : index
      %c0_47 = arith.constant 0 : index
      %c0_48 = arith.constant 0 : index
      %83 = vector.load %arg4[%c0_46, %c3, %c0_47, %c0_48] : memref<1x4x8x300xf32, #tpu.memory_space<vmem>>, vector<1x1x8x300xf32>
      %84 = vector.shape_cast %83 : vector<1x1x8x300xf32> to vector<8x300xf32>
      %cst_49 = arith.constant 1.000000e+00 : f32
      %cst_50 = arith.constant 0.000000e+00 : f32
      %85 = vector.broadcast %cst_49 : f32 to vector<16x300xf32>
      %86 = vector.broadcast %cst_50 : f32 to vector<16x300xf32>
      %87 = arith.select %52, %85, %86 : vector<16x300xi1>, vector<16x300xf32>
      %88 = vector.shape_cast %87 : vector<16x300xf32> to vector<2x8x300xf32>
      %cst_51 = arith.constant dense<0.000000e+00> : vector<8x300xf32>
      %89 = vector.multi_reduction <add>, %88, %cst_51 [0] : vector<2x8x300xf32> to vector<8x300xf32>
      %90 = arith.addf %84, %89 : vector<8x300xf32>
      %c0_52 = arith.constant 0 : index
      %c3_53 = arith.constant 3 : index
      %c0_54 = arith.constant 0 : index
      %c0_55 = arith.constant 0 : index
      %91 = vector.load %arg4[%c0_52, %c3_53, %c0_54, %c0_55] : memref<1x4x8x300xf32, #tpu.memory_space<vmem>>, vector<1x1x8x300xf32>
      %92 = vector.shape_cast %91 : vector<1x1x8x300xf32> to vector<8x300xf32>
      %93 = vector.shape_cast %90 : vector<8x300xf32> to vector<1x1x8x300xf32>
      tpu.vector_store %arg4[%c0_52, %c3_53, %c0_54, %c0_55], %93 {strides = array<i32>} : memref<1x4x8x300xf32, #tpu.memory_space<vmem>>, vector<1x1x8x300xf32>,
      %c1_i32_56 = arith.constant 1 : i32
    } else {
    }
    return
  }
  func.func @transform_0(%arg0: i32, %arg1: i32) -> (i32, i32) {
    %c1_i32 = arith.constant 1 : i32
    %0 = arith.muli %arg0, %c1_i32 : i32
    %1 = arith.addi %0, %arg1 : i32
    %c0_i32 = arith.constant 0 : i32
    %2 = arith.minsi %1, %c0_i32 : i32
    %c0_i32_0 = arith.constant 0 : i32
    %c0_i32_1 = arith.constant 0 : i32
    return %2, %c0_i32_0 : i32, i32
  }
  func.func @transform_1(%arg0: i32, %arg1: i32) -> (i32, i32) {
    %c1_i32 = arith.constant 1 : i32
    %0 = arith.muli %arg0, %c1_i32 : i32
    %1 = arith.addi %0, %arg1 : i32
    %c0_i32 = arith.constant 0 : i32
    %2 = arith.minsi %1, %c0_i32 : i32
    %c0_i32_0 = arith.constant 0 : i32
    %c0_i32_1 = arith.constant 0 : i32
    return %2, %c0_i32_0 : i32, i32
  }
  func.func @transform_2(%arg0: i32, %arg1: i32) -> (i32, i32, i32, i32) {
    %c0_i32 = arith.constant 0 : i32
    %c0_i32_0 = arith.constant 0 : i32
    %c0_i32_1 = arith.constant 0 : i32
    %c0_i32_2 = arith.constant 0 : i32
    return %arg0, %c0_i32, %c0_i32_0, %c0_i32_1 : i32, i32, i32, i32
  }
}

</mosaic_0001>

<llo_original>
// kernel: tpu_custom_call.1
$region0: #{tpu_custom_call.1}
  #allocation0 [shape = 'u32[]', space=smem, size = 0x4, offset = 0x4, fixed_abs, tag = 'smem constant byte address 0x4 - core index']
  #allocation1 [shape = 'u32[144,128]{1,0:T(1,128)}', space=vmem, size = 0x12000, scoped, tag = 'internal scratch']
  %s0 = inlined_call_operand.hbm [shape: f32[4,300], index: 0, kind: input, shape index: {}]
  %s1 = inlined_call_operand.hbm [shape: s32[4,300], index: 1, kind: input, shape index: {}]
  %s2 = inlined_call_operand.hbm [shape: f32[2,4,8,300], index: 2, kind: output, shape index: {}]
  %s3 = sld [smem:[#allocation0]]
  $region61: #{tpu_custom_call.1} parent=0
    _
  %s5 = ssub.s32 1, %s3
  %s6 = scalar_select 0, %s5, %s3
  $region1: #{tpu_custom_call.1} parent=0
    #allocation2 [shape = 'u8[49152]{0}', space=vmem, size = 0xc000, scoped, tag = 'input window, operand 0']
    #allocation3 [shape = 's32[2]{0}', space=sflag, size = 0x8, scoped, tag = 'scoped memory for tpu_custom_call.1']
    #allocation4 [shape = 's32[2]{0}', space=sflag, size = 0x8, scoped, tag = 'scoped memory for tpu_custom_call.1']
    #allocation5 [shape = 'u8[49152]{0}', space=vmem, size = 0xc000, scoped, tag = 'input window, operand 1']
    #allocation6 [shape = 's32[2]{0}', space=sflag, size = 0x8, scoped, tag = 'scoped memory for tpu_custom_call.1']
    #allocation7 [shape = 'u8[98304]{0}', space=vmem, size = 0x18000, scoped, tag = 'output window, operand 0']
    %7 = vsyncpa [#allocation3], 0
    %s8 = scalar_lea.sflag [#allocation3], 1
    %9 = vsyncpa %s8, 0
    %10 = vsyncpa [#allocation6], 0
    %s11 = scalar_lea.sflag [#allocation6], 1
    %12 = vsyncpa %s11, 0
    %13 = vsyncpa [#allocation4], 0
    %s14 = scalar_lea.sflag [#allocation4], 1
    %15 = vsyncpa %s14, 0
    loop: start=0, step=1, limit=4
    $region2: #{tpu_custom_call.1} parent=1 // loop_pre_header
      _
    $region3: #{tpu_custom_call.1} parent=1 // loop_header
      %s17 = sphi 0, %s21
      %p18 = scmp.ge.s32.totalorder %s17, 4
      %s24 = sphi 0, %s36
      %s25 = sphi 0, %s32
      %s26 = sphi 0, %s24
      %s27 = sphi 0, %s25
      %s28 = sphi 0, %s26
      %s29 = sphi 0, %s27
      %s45 = sphi 0, %s47
      %s48 = sphi 0, %s45
      %s49 = sphi 0, %s48
      %s65 = sphi 0, %s49
      %s77 = sphi 0, %s79
      %s80 = sphi 0, %s77
      %s81 = sphi 0, %s80
      %s97 = sphi 0, %s81
      %s103 = sphi 0, %s105
      %s106 = sphi 0, %s103
      %s107 = sphi 0, %s106
      %s123 = sphi 0, %s107
    $region4: #{tpu_custom_call.1} parent=1 // loop_header_branch
      %20 = sbr.rel (%p18) target = $region8
    $region5: #{tpu_custom_call.1} parent=1 // loop_body
      %s22 = ssub.s32 %s17, 1
      %s23 = ssub.s32 %s17, 2
      %s30 = sadd.s32 1, %s25
      %p31 = scmp.ge.s32.totalorder %s30, 1
      %s32 = scalar_select %p31, 0, %s30
      %s33 = sadd.s32 1, %s24
      %s34 = scalar_select %p31, %s33, %s24
      %p35 = scmp.ge.s32.totalorder %s34, 2
      %s36 = scalar_select %p35, 0, %s34
      %s37 = sadd.s32 %s24, %s25
      %p38 = scmp.lt.s32.totalorder %s37, 0
      %s39 = scalar_select %p38, %s37, 0
      %s40 = sadd.s32 %s36, %s32
      %p41 = scmp.lt.s32.totalorder %s40, 0
      %s42 = scalar_select %p41, %s40, 0
      %s43 = ssub.s32 %s39, %s42
      %p44 = scmp.eq.s32.totalorder %s43, 0
      %s46 = sadd.s32 %s45, 1
      %s47 = scalar_select %p44, %s45, %s46
      %p50 = pneg %p44
      %p51 = scmp.eq.s32.totalorder %s17, 1
      %p52 = por %p50, %p51
      %p53 = scmp.ne.s32.totalorder %s45, %s48
      %p54 = scmp.eq.s32.totalorder %s17, 0
      %p55 = por %p53, %p54
      %p56 = scmp.ne.s32.totalorder %s45, %s48
      %p57 = scmp.eq.s32.totalorder %s22, 1
      %p58 = por %p56, %p57
      %p59 = scmp.ne.s32.totalorder %s48, %s49
      %p60 = scmp.eq.s32.totalorder %s22, 0
      %p61 = por %p59, %p60
      %p62 = scmp.ne.s32.totalorder %s48, %s49
      %p63 = scmp.eq.s32.totalorder %s23, 1
      %p64 = por %p62, %p63
      %p66 = scmp.ne.s32.totalorder %s49, %s65
      %p67 = scmp.eq.s32.totalorder %s23, 0
      %p68 = por %p66, %p67
      %s69 = sadd.s32 %s24, %s25
      %p70 = scmp.lt.s32.totalorder %s69, 0
      %s71 = scalar_select %p70, %s69, 0
      %s72 = sadd.s32 %s36, %s32
      %p73 = scmp.lt.s32.totalorder %s72, 0
      %s74 = scalar_select %p73, %s72, 0
      %s75 = ssub.s32 %s71, %s74
      %p76 = scmp.eq.s32.totalorder %s75, 0
      %s78 = sadd.s32 %s77, 1
      %s79 = scalar_select %p76, %s77, %s78
      %p82 = pneg %p76
      %p83 = scmp.eq.s32.totalorder %s17, 1
      %p84 = por %p82, %p83
      %p85 = scmp.ne.s32.totalorder %s77, %s80
      %p86 = scmp.eq.s32.totalorder %s17, 0
      %p87 = por %p85, %p86
      %p88 = scmp.ne.s32.totalorder %s77, %s80
      %p89 = scmp.eq.s32.totalorder %s22, 1
      %p90 = por %p88, %p89
      %p91 = scmp.ne.s32.totalorder %s80, %s81
      %p92 = scmp.eq.s32.totalorder %s22, 0
      %p93 = por %p91, %p92
      %p94 = scmp.ne.s32.totalorder %s80, %s81
      %p95 = scmp.eq.s32.totalorder %s23, 1
      %p96 = por %p94, %p95
      %p98 = scmp.ne.s32.totalorder %s81, %s97
      %p99 = scmp.eq.s32.totalorder %s23, 0
      %p100 = por %p98, %p99
      %s101 = ssub.s32 %s24, %s36
      %p102 = scmp.eq.s32.totalorder %s101, 0
      %s104 = sadd.s32 %s103, 1
      %s105 = scalar_select %p102, %s103, %s104
      %p108 = pneg %p102
      %p109 = scmp.eq.s32.totalorder %s17, 1
      %p110 = por %p108, %p109
      %p111 = scmp.ne.s32.totalorder %s103, %s106
      %p112 = scmp.eq.s32.totalorder %s17, 0
      %p113 = por %p111, %p112
      %p114 = scmp.ne.s32.totalorder %s103, %s106
      %p115 = scmp.eq.s32.totalorder %s22, 1
      %p116 = por %p114, %p115
      %p117 = scmp.ne.s32.totalorder %s106, %s107
      %p118 = scmp.eq.s32.totalorder %s22, 0
      %p119 = por %p117, %p118
      %p120 = scmp.ne.s32.totalorder %s106, %s107
      %p121 = scmp.eq.s32.totalorder %s23, 1
      %p122 = por %p120, %p121
      %p124 = scmp.ne.s32.totalorder %s107, %s123
      %p125 = scmp.eq.s32.totalorder %s23, 0
      %p126 = por %p124, %p125
      %p127 = scmp.le.s32.totalorder 1, %s17
      %p128 = scmp.lt.s32.totalorder %s17, 3
      %p129 = pnand %p127, %p128
      %p130 = pneg %p129
      // Predicated region
      $region9: #{tpu_custom_call.1} parent=5 // pred_check
        _
      $region10: #{tpu_custom_call.1} parent=5 // pred_check_branch
        %132 = sbr.rel (%p129) target = $region12
      $region11: #{tpu_custom_call.1} parent=5 // pred_region
        %s133 = ssub.s32 %s17, 1
      $region12: #{tpu_custom_call.1} parent=5 // pred_fallthru
        _
      %p134 = scmp.lt.s32.totalorder %s17, 2
      // Predicated region
      $region13: #{tpu_custom_call.1} parent=5 // pred_check
        %p135 = pneg %p134
      $region14: #{tpu_custom_call.1} parent=5 // pred_check_branch
        %137 = sbr.rel (%p135) target = $region16
      $region15: #{tpu_custom_call.1} parent=5 // pred_region
        // Predicated region
        $region17: #{tpu_custom_call.1} parent=15 // pred_check
          %p138 = pneg %p55
        $region18: #{tpu_custom_call.1} parent=15 // pred_check_branch
          %140 = sbr.rel (%p138) target = $region20
        $region19: #{tpu_custom_call.1} parent=15 // pred_region
          %s141 = sand.u32 %s45, 1
          %s142 = scalar_lea.sflag [#allocation3], %s141
          %s143 = sand.u32 %s45, 1
          %s144 = smul.addr %s143, 48
          %s145 = scalar_lea.vmem [#allocation2], %s144
          %s146 = sadd.s32 %s24, %s25
          %p147 = scmp.lt.s32.totalorder %s146, 0
          %s148 = scalar_select %p147, %s146, 0
          %s149 = smul.u32 4, %s148
          %s150 = ssub.s32 1, %s149
          %s151 = smul.u32 64, %s150
          %s152 = smul.u32 %s151, 3
          %s154 = ssub.s32 768, %s152
          %155 = vsyncadd %s142, %s154
          %p156 = scmp.ne.s32.totalorder 0, %s152
          %s157 = smul.addr %s149, 3
          %s158 = smul.addr %s157, 64
          %s159 = scalar_lea.hbm %s0, %s158
          %s160 = smul.u32 12, %s150
          %s161 = sshll.u32 %s145, 4
          %s162 = int_to_ptr.vmem [resolvable:$true] %s161
          %s163 = sshll.u32 %s160, 4
          %167 = dma.hbm_to_vmem [thread:$0]  (%p156), %s159, %s163, %s162, %s142, 192, 192, 12
        $region20: #{tpu_custom_call.1} parent=15 // pred_fallthru
          _
        // Predicated region
        $region21: #{tpu_custom_call.1} parent=15 // pred_check
          %p168 = pneg %p87
        $region22: #{tpu_custom_call.1} parent=15 // pred_check_branch
          %170 = sbr.rel (%p168) target = $region24
        $region23: #{tpu_custom_call.1} parent=15 // pred_region
          %s171 = sand.u32 %s77, 1
          %s172 = scalar_lea.sflag [#allocation6], %s171
          %s173 = sand.u32 %s77, 1
          %s174 = smul.addr %s173, 48
          %s175 = scalar_lea.vmem [#allocation5], %s174
          %s176 = sadd.s32 %s24, %s25
          %p177 = scmp.lt.s32.totalorder %s176, 0
          %s178 = scalar_select %p177, %s176, 0
          %s179 = smul.u32 4, %s178
          %s180 = ssub.s32 1, %s179
          %s181 = smul.u32 64, %s180
          %s182 = smul.u32 %s181, 3
          %s184 = ssub.s32 768, %s182
          %185 = vsyncadd %s172, %s184
          %p186 = scmp.ne.s32.totalorder 0, %s182
          %s187 = smul.addr %s179, 3
          %s188 = smul.addr %s187, 64
          %s189 = scalar_lea.hbm %s1, %s188
          %s190 = smul.u32 12, %s180
          %s191 = sshll.u32 %s175, 4
          %s192 = int_to_ptr.vmem [resolvable:$true] %s191
          %s193 = sshll.u32 %s190, 4
          %197 = dma.hbm_to_vmem [thread:$0]  (%p186), %s189, %s193, %s192, %s172, 192, 192, 12
        $region24: #{tpu_custom_call.1} parent=15 // pred_fallthru
          _
      $region16: #{tpu_custom_call.1} parent=5 // pred_fallthru
        _
      %p198 = scmp.le.s32.totalorder 1, %s17
      %p199 = scmp.lt.s32.totalorder %s17, 3
      %p200 = pnand %p198, %p199
      %p201 = pneg %p200
      // Predicated region
      $region25: #{tpu_custom_call.1} parent=5 // pred_check
        _
      $region26: #{tpu_custom_call.1} parent=5 // pred_check_branch
        %203 = sbr.rel (%p200) target = $region28
      $region27: #{tpu_custom_call.1} parent=5 // pred_region
        %s204 = ssub.s32 %s17, 1
        %s205 = sand.u32 %s48, 1
        %s206 = scalar_lea.sflag [#allocation3], %s205
        %s207 = sand.u32 %s48, 1
        %s208 = smul.addr %s207, 48
        %s209 = scalar_lea.vmem [#allocation2], %s208
        // Predicated region
        $region29: #{tpu_custom_call.1} parent=27 // pred_check
          %p210 = pneg %p61
        $region30: #{tpu_custom_call.1} parent=27 // pred_check_branch
          %212 = sbr.rel (%p210) target = $region32
        $region31: #{tpu_custom_call.1} parent=27 // pred_region
          %213 = dma.done %s206, 768
        $region32: #{tpu_custom_call.1} parent=27 // pred_fallthru
          _
        %s214 = sand.u32 %s80, 1
        %s215 = scalar_lea.sflag [#allocation6], %s214
        %s216 = sand.u32 %s80, 1
        %s217 = smul.addr %s216, 48
        %s218 = scalar_lea.vmem [#allocation5], %s217
        // Predicated region
        $region33: #{tpu_custom_call.1} parent=27 // pred_check
          %p219 = pneg %p93
        $region34: #{tpu_custom_call.1} parent=27 // pred_check_branch
          %221 = sbr.rel (%p219) target = $region36
        $region35: #{tpu_custom_call.1} parent=27 // pred_region
          %222 = dma.done %s215, 768
        $region36: #{tpu_custom_call.1} parent=27 // pred_fallthru
          _
        %s223 = sand.u32 %s48, 1
        %s224 = scalar_lea.sflag [#allocation3], %s223
        %s225 = sand.u32 %s48, 1
        %s226 = smul.addr %s225, 48
        %s227 = scalar_lea.vmem [#allocation2], %s226
        %p228 = pneg %p61
        %p229 = pneg %p58
        %s230 = sand.u32 %s80, 1
        %s231 = scalar_lea.sflag [#allocation6], %s230
        %s232 = sand.u32 %s80, 1
        %s233 = smul.addr %s232, 48
        %s234 = scalar_lea.vmem [#allocation5], %s233
        %p235 = pneg %p93
        %p236 = pneg %p90
        %p237 = pneg %p119
        %p238 = pneg %p116
        %s239 = sand.u32 %s106, 1
        %s240 = scalar_lea.sflag [#allocation4], %s239
        %s241 = sand.u32 %s106, 1
        %s242 = smul.addr %s241, 96
        %s243 = scalar_lea.vmem [#allocation7], %s242
        %s244 = sadd.s32 %s26, %s27
        %p245 = scmp.lt.s32.totalorder %s244, 0
        %s246 = scalar_select %p245, %s244, 0
        %s247 = smul.u32 4, %s246
        %s248 = ssub.s32 1, %s247
        %s249 = smul.u32 64, %s248
        %s250 = smul.u32 %s249, 3
        %s251 = sadd.s32 %s26, %s27
        %p252 = scmp.lt.s32.totalorder %s251, 0
        %s253 = scalar_select %p252, %s251, 0
        %s254 = smul.u32 4, %s253
        %s255 = ssub.s32 1, %s254
        %s256 = smul.u32 64, %s255
        %s257 = smul.u32 %s256, 3
        %s258 = sadd.s32 %s26, %s27
        %p259 = scmp.eq.s32.totalorder %s27, 0
        // Predicated region
        $region37: #{tpu_custom_call.1} parent=27 // pred_check
          %p260 = pneg %p259
        $region38: #{tpu_custom_call.1} parent=27 // pred_check_branch
          %262 = sbr.rel (%p260) target = $region40
        $region39: #{tpu_custom_call.1} parent=27 // pred_region
          %263 = vst [vmem:[%s243] sm:$0xff] 0.0
          %264 = vst [vmem:[%s243 + $0x8] sm:$0xff] 0.0
          %vm265 = vcmask 359424
          %266 = vst.msk [vmem:[%s243 + $0x10] sm:$0xff] %vm265, 0.0
          %267 = vst [vmem:[%s243 + $0x18] sm:$0xff] 0.0
          %268 = vst [vmem:[%s243 + $0x20] sm:$0xff] 0.0
          %269 = vst.msk [vmem:[%s243 + $0x28] sm:$0xff] %vm265, 0.0
          %270 = vst [vmem:[%s243 + $0x30] sm:$0xff] 0.0
          %271 = vst [vmem:[%s243 + $0x38] sm:$0xff] 0.0
          %272 = vst.msk [vmem:[%s243 + $0x40] sm:$0xff] %vm265, 0.0
          %273 = vst [vmem:[%s243 + $0x48] sm:$0xff] 0.0
          %274 = vst [vmem:[%s243 + $0x50] sm:$0xff] 0.0
          %275 = vst.msk [vmem:[%s243 + $0x58] sm:$0xff] %vm265, 0.0
        $region40: #{tpu_custom_call.1} parent=27 // pred_fallthru
          _
        %s276 = sadd.s32 %s258, 1
        %s277 = smul.u32 %s276, 16
        %p278 = scmp.le.s32.totalorder %s277, 4
        // Predicated region
        $region41: #{tpu_custom_call.1} parent=27 // pred_check
          %p279 = pneg %p278
        $region42: #{tpu_custom_call.1} parent=27 // pred_check_branch
          %281 = sbr.rel (%p279) target = $region44
        $region43: #{tpu_custom_call.1} parent=27 // pred_region
          %s282 = smul.u32 0, 3
          %s283 = smul.addr %s282, 4
          %s284 = scalar_lea.vmem %s209, %s283 [#allocation2]
          %v285 = vld [vmem:[%s284] sm:$0xff]
          %v286 = vld [vmem:[%s284 + $0x8] sm:$0xf]
          %v287 = vld [vmem:[%s284 + $0xc] sm:$0xff]
          %v288 = vld [vmem:[%s284 + $0x14] sm:$0xf]
          %v289 = vld [vmem:[%s284 + $0x18] sm:$0xff]
          %v290 = vld [vmem:[%s284 + $0x20] sm:$0xf]
          %v291 = vld [vmem:[%s284 + $0x24] sm:$0xff]
          %v292 = vld [vmem:[%s284 + $0x2c] sm:$0xf]
          %v293 = vmax.f32 %v285, -30.0
          %v294 = vmax.f32 %v286, -30.0
          %v295 = vmax.f32 %v287, -30.0
          %v296 = vmax.f32 %v288, -30.0
          %v297 = vmax.f32 %v289, -30.0
          %v298 = vmax.f32 %v290, -30.0
          %v299 = vmax.f32 %v291, -30.0
          %v300 = vmax.f32 %v292, -30.0
          %s301 = smul.addr %s282, 4
          %s302 = scalar_lea.vmem %s218, %s301 [#allocation5]
          %v303 = vld [vmem:[%s302] sm:$0xff]
          %v304 = vld [vmem:[%s302 + $0x8] sm:$0xf]
          %v305 = vld [vmem:[%s302 + $0xc] sm:$0xff]
          %v306 = vld [vmem:[%s302 + $0x14] sm:$0xf]
          %v307 = vld [vmem:[%s302 + $0x18] sm:$0xff]
          %v308 = vld [vmem:[%s302 + $0x20] sm:$0xf]
          %v309 = vld [vmem:[%s302 + $0x24] sm:$0xff]
          %v310 = vld [vmem:[%s302 + $0x2c] sm:$0xf]
          %vm311 = vcmp.eq.s32.totalorder %v303, 1
          %vm312 = vcmp.eq.s32.totalorder %v304, 1
          %vm313 = vcmp.eq.s32.totalorder %v305, 1
          %vm314 = vcmp.eq.s32.totalorder %v306, 1
          %vm315 = vcmp.eq.s32.totalorder %v307, 1
          %vm316 = vcmp.eq.s32.totalorder %v308, 1
          %vm317 = vcmp.eq.s32.totalorder %v309, 1
          %vm318 = vcmp.eq.s32.totalorder %v310, 1
          %v319 = vsub.f32 0.0, %v293
          %v320 = vsub.f32 0.0, %v294
          %v321 = vsub.f32 0.0, %v295
          %v322 = vsub.f32 0.0, %v296
          %v323 = vsub.f32 0.0, %v297
          %v324 = vsub.f32 0.0, %v298
          %v325 = vsub.f32 0.0, %v299
          %v326 = vsub.f32 0.0, %v300
          %v327 = vmul.f32 %v319, 1.442695
          %v328 = vpow.pop %v327
          %v329 = vmul.f32 %v320, 1.442695
          %v330 = vpow.pop %v329
          %v331 = vmul.f32 %v321, 1.442695
          %v332 = vpow.pop %v331
          %v333 = vmul.f32 %v322, 1.442695
          %v334 = vpow.pop %v333
          %v335 = vmul.f32 %v323, 1.442695
          %v336 = vpow.pop %v335
          %v337 = vmul.f32 %v324, 1.442695
          %v338 = vpow.pop %v337
          %v339 = vmul.f32 %v325, 1.442695
          %v340 = vpow.pop %v339
          %v341 = vmul.f32 %v326, 1.442695
          %v342 = vpow.pop %v341
          %v343 = vadd.f32 %v328, 1.0
          %v344 = vadd.f32 %v330, 1.0
          %v345 = vadd.f32 %v332, 1.0
          %v346 = vadd.f32 %v334, 1.0
          %v347 = vadd.f32 %v336, 1.0
          %v348 = vadd.f32 %v338, 1.0
          %v349 = vadd.f32 %v340, 1.0
          %v350 = vadd.f32 %v342, 1.0
          %v351 = vrcp.pop %v343
          %v352 = vrcp.pop %v344
          %v353 = vrcp.pop %v345
          %v354 = vrcp.pop %v346
          %v355 = vrcp.pop %v347
          %v356 = vrcp.pop %v348
          %v357 = vrcp.pop %v349
          %v358 = vrcp.pop %v350
          %v359 = vmul.f32 %v328, 2.7182817
          %v360 = vmul.f32 %v330, 2.7182817
          %v361 = vmul.f32 %v332, 2.7182817
          %v362 = vmul.f32 %v334, 2.7182817
          %v363 = vmul.f32 %v336, 2.7182817
          %v364 = vmul.f32 %v338, 2.7182817
          %v365 = vmul.f32 %v340, 2.7182817
          %v366 = vmul.f32 %v342, 2.7182817
          %v367 = vadd.f32 %v359, 1.0
          %v368 = vadd.f32 %v360, 1.0
          %v369 = vadd.f32 %v361, 1.0
          %v370 = vadd.f32 %v362, 1.0
          %v371 = vadd.f32 %v363, 1.0
          %v372 = vadd.f32 %v364, 1.0
          %v373 = vadd.f32 %v365, 1.0
          %v374 = vadd.f32 %v366, 1.0
          %v375 = vrcp.pop %v367
          %v376 = vrcp.pop %v368
          %v377 = vrcp.pop %v369
          %v378 = vrcp.pop %v370
          %v379 = vrcp.pop %v371
          %v380 = vrcp.pop %v372
          %v381 = vrcp.pop %v373
          %v382 = vrcp.pop %v374
          %v383 = vmul.f32 %v328, 0.36787945
          %v384 = vmul.f32 %v330, 0.36787945
          %v385 = vmul.f32 %v332, 0.36787945
          %v386 = vmul.f32 %v334, 0.36787945
          %v387 = vmul.f32 %v336, 0.36787945
          %v388 = vmul.f32 %v338, 0.36787945
          %v389 = vmul.f32 %v340, 0.36787945
          %v390 = vmul.f32 %v342, 0.36787945
          %v391 = vadd.f32 %v383, 1.0
          %v392 = vadd.f32 %v384, 1.0
          %v393 = vadd.f32 %v385, 1.0
          %v394 = vadd.f32 %v386, 1.0
          %v395 = vadd.f32 %v387, 1.0
          %v396 = vadd.f32 %v388, 1.0
          %v397 = vadd.f32 %v389, 1.0
          %v398 = vadd.f32 %v390, 1.0
          %v399 = vrcp.pop %v391
          %v400 = vrcp.pop %v392
          %v401 = vrcp.pop %v393
          %v402 = vrcp.pop %v394
          %v403 = vrcp.pop %v395
          %v404 = vrcp.pop %v396
          %v405 = vrcp.pop %v397
          %v406 = vrcp.pop %v398
          %v407 = vsub.f32 1.0, %v375
          %v408 = vsub.f32 1.0, %v376
          %v409 = vsub.f32 1.0, %v377
          %v410 = vsub.f32 1.0, %v378
          %v411 = vsub.f32 1.0, %v379
          %v412 = vsub.f32 1.0, %v380
          %v413 = vsub.f32 1.0, %v381
          %v414 = vsub.f32 1.0, %v382
          %v415 = vmul.f32 %v351, %v407
          %v416 = vmul.f32 %v352, %v408
          %v417 = vmul.f32 %v353, %v409
          %v418 = vmul.f32 %v354, %v410
          %v419 = vmul.f32 %v355, %v411
          %v420 = vmul.f32 %v356, %v412
          %v421 = vmul.f32 %v357, %v413
          %v422 = vmul.f32 %v358, %v414
          %v423 = vsub.f32 1.0, %v351
          %v424 = vsub.f32 1.0, %v352
          %v425 = vsub.f32 1.0, %v353
          %v426 = vsub.f32 1.0, %v354
          %v427 = vsub.f32 1.0, %v355
          %v428 = vsub.f32 1.0, %v356
          %v429 = vsub.f32 1.0, %v357
          %v430 = vsub.f32 1.0, %v358
          %v431 = vmul.f32 %v399, %v423
          %v432 = vmul.f32 %v400, %v424
          %v433 = vmul.f32 %v401, %v425
          %v434 = vmul.f32 %v402, %v426
          %v435 = vmul.f32 %v403, %v427
          %v436 = vmul.f32 %v404, %v428
          %v437 = vmul.f32 %v405, %v429
          %v438 = vmul.f32 %v406, %v430
          %v439 = vld [vmem:[%s243] sm:$0xff]
          %v440 = vld [vmem:[%s243 + $0x8] sm:$0xff]
          %v441 = vld [vmem:[%s243 + $0x10] sm:$0xff]
          %v442 = vsel %vm311, %v415, 0.0
          %v443 = vsel %vm312, %v416, 0.0
          %v444 = vsel %vm313, %v417, 0.0
          %v445 = vsel %vm314, %v418, 0.0
          %v446 = vsel %vm315, %v419, 0.0
          %v447 = vsel %vm316, %v420, 0.0
          %v448 = vsel %vm317, %v421, 0.0
          %v449 = vsel %vm318, %v422, 0.0
          %v458 = vcombine.low %v442, %v444
          %v459 = vcombine.high %v442, %v444
          %v460 = vcombine.low %v443, %v445
          %v461 = vcombine.low %v446, %v448
          %v462 = vcombine.high %v446, %v448
          %v463 = vcombine.low %v447, %v449
          %v470 = vadd.f32 %v458, %v461
          %v471 = vadd.f32 %v459, %v462
          %vm472 = vcmask 359424
          %v473 = vsel %vm472, %v460, 0.0
          %v474 = vsel %vm472, %v463, 0.0
          %v475 = vadd.f32 %v473, %v474
          %v476 = vadd.f32 %v439, %v470
          %v477 = vadd.f32 %v440, %v471
          %v478 = vadd.f32 %v441, %v475
          %479 = vst [vmem:[%s243] sm:$0xff] %v476
          %480 = vst [vmem:[%s243 + $0x8] sm:$0xff] %v477
          %481 = vst.msk [vmem:[%s243 + $0x10] sm:$0xff] %vm472, %v478
          %s482 = scalar_lea.vmem %s243, 24 [#allocation7]
          %v483 = vld [vmem:[%s482] sm:$0xff]
          %v484 = vld [vmem:[%s482 + $0x8] sm:$0xff]
          %v485 = vld [vmem:[%s482 + $0x10] sm:$0xff]
          %v486 = vsel %vm311, %v431, 0.0
          %v487 = vsel %vm312, %v432, 0.0
          %v488 = vsel %vm313, %v433, 0.0
          %v489 = vsel %vm314, %v434, 0.0
          %v490 = vsel %vm315, %v435, 0.0
          %v491 = vsel %vm316, %v436, 0.0
          %v492 = vsel %vm317, %v437, 0.0
          %v493 = vsel %vm318, %v438, 0.0
          %v502 = vcombine.low %v486, %v488
          %v503 = vcombine.high %v486, %v488
          %v504 = vcombine.low %v487, %v489
          %v505 = vcombine.low %v490, %v492
          %v506 = vcombine.high %v490, %v492
          %v507 = vcombine.low %v491, %v493
          %v514 = vadd.f32 %v502, %v505
          %v515 = vadd.f32 %v503, %v506
          %v516 = vsel %vm472, %v504, 0.0
          %v517 = vsel %vm472, %v507, 0.0
          %v518 = vadd.f32 %v516, %v517
          %v519 = vadd.f32 %v483, %v514
          %v520 = vadd.f32 %v484, %v515
          %v521 = vadd.f32 %v485, %v518
          %522 = vst [vmem:[%s482] sm:$0xff] %v519
          %523 = vst [vmem:[%s482 + $0x8] sm:$0xff] %v520
          %524 = vst.msk [vmem:[%s482 + $0x10] sm:$0xff] %vm472, %v521
          %s525 = scalar_lea.vmem %s243, 48 [#allocation7]
          %v526 = vld [vmem:[%s525] sm:$0xff]
          %v527 = vld [vmem:[%s525 + $0x8] sm:$0xff]
          %v528 = vld [vmem:[%s525 + $0x10] sm:$0xff]
          %v537 = vcombine.low %v431, %v433
          %v538 = vcombine.high %v431, %v433
          %v539 = vcombine.low %v432, %v434
          %v540 = vcombine.low %v435, %v437
          %v541 = vcombine.high %v435, %v437
          %v542 = vcombine.low %v436, %v438
          %v549 = vadd.f32 %v537, %v540
          %v550 = vadd.f32 %v538, %v541
          %v551 = vsel %vm472, %v539, 0.0
          %v552 = vsel %vm472, %v542, 0.0
          %v553 = vadd.f32 %v551, %v552
          %v554 = vadd.f32 %v526, %v549
          %v555 = vadd.f32 %v527, %v550
          %v556 = vadd.f32 %v528, %v553
          %557 = vst [vmem:[%s525] sm:$0xff] %v554
          %558 = vst [vmem:[%s525 + $0x8] sm:$0xff] %v555
          %559 = vst.msk [vmem:[%s525 + $0x10] sm:$0xff] %vm472, %v556
          %s560 = scalar_lea.vmem %s243, 72 [#allocation7]
          %v561 = vld [vmem:[%s560] sm:$0xff]
          %v562 = vld [vmem:[%s560 + $0x8] sm:$0xff]
          %v563 = vld [vmem:[%s560 + $0x10] sm:$0xff]
          %v564 = vsel %vm311, 1.0, 0.0
          %v565 = vsel %vm312, 1.0, 0.0
          %v566 = vsel %vm313, 1.0, 0.0
          %v567 = vsel %vm314, 1.0, 0.0
          %v568 = vsel %vm315, 1.0, 0.0
          %v569 = vsel %vm316, 1.0, 0.0
          %v570 = vsel %vm317, 1.0, 0.0
          %v571 = vsel %vm318, 1.0, 0.0
          %v580 = vcombine.low %v564, %v566
          %v581 = vcombine.high %v564, %v566
          %v582 = vcombine.low %v565, %v567
          %v583 = vcombine.low %v568, %v570
          %v584 = vcombine.high %v568, %v570
          %v585 = vcombine.low %v569, %v571
          %v592 = vadd.f32 %v580, %v583
          %v593 = vadd.f32 %v581, %v584
          %v594 = vsel %vm472, %v582, 0.0
          %v595 = vsel %vm472, %v585, 0.0
          %v596 = vadd.f32 %v594, %v595
          %v597 = vadd.f32 %v561, %v592
          %v598 = vadd.f32 %v562, %v593
          %v599 = vadd.f32 %v563, %v596
          %600 = vst [vmem:[%s560] sm:$0xff] %v597
          %601 = vst [vmem:[%s560 + $0x8] sm:$0xff] %v598
          %602 = vst.msk [vmem:[%s560 + $0x10] sm:$0xff] %vm472, %v599
        $region44: #{tpu_custom_call.1} parent=27 // pred_fallthru
          _
        %p603 = scmp.gt.s32.totalorder %s277, 4
        // Predicated region
        $region45: #{tpu_custom_call.1} parent=27 // pred_check
          %p604 = pneg %p603
        $region46: #{tpu_custom_call.1} parent=27 // pred_check_branch
          %606 = sbr.rel (%p604) target = $region48
        $region47: #{tpu_custom_call.1} parent=27 // pred_region
          %s607 = smul.u32 0, 3
          %s608 = smul.addr %s607, 4
          %s609 = scalar_lea.vmem %s209, %s608 [#allocation2]
          %v610 = vld [vmem:[%s609] sm:$0xff]
          %v611 = vld [vmem:[%s609 + $0x8] sm:$0xf]
          %v612 = vld [vmem:[%s609 + $0xc] sm:$0xff]
          %v613 = vld [vmem:[%s609 + $0x14] sm:$0xf]
          %v614 = vld [vmem:[%s609 + $0x18] sm:$0xff]
          %v615 = vld [vmem:[%s609 + $0x20] sm:$0xf]
          %v616 = vld [vmem:[%s609 + $0x24] sm:$0xff]
          %v617 = vld [vmem:[%s609 + $0x2c] sm:$0xf]
          %v618 = vmax.f32 %v610, -30.0
          %v619 = vmax.f32 %v611, -30.0
          %v620 = vmax.f32 %v612, -30.0
          %v621 = vmax.f32 %v613, -30.0
          %v622 = vmax.f32 %v614, -30.0
          %v623 = vmax.f32 %v615, -30.0
          %v624 = vmax.f32 %v616, -30.0
          %v625 = vmax.f32 %v617, -30.0
          %s626 = smul.addr %s607, 4
          %s627 = scalar_lea.vmem %s218, %s626 [#allocation5]
          %v628 = vld [vmem:[%s627] sm:$0xff]
          %v629 = vld [vmem:[%s627 + $0x8] sm:$0xf]
          %v630 = vld [vmem:[%s627 + $0xc] sm:$0xff]
          %v631 = vld [vmem:[%s627 + $0x14] sm:$0xf]
          %v632 = vld [vmem:[%s627 + $0x18] sm:$0xff]
          %v633 = vld [vmem:[%s627 + $0x20] sm:$0xf]
          %v634 = vld [vmem:[%s627 + $0x24] sm:$0xff]
          %v635 = vld [vmem:[%s627 + $0x2c] sm:$0xf]
          %vm636 = vcmp.eq.s32.totalorder %v628, 1
          %vm637 = vcmp.eq.s32.totalorder %v629, 1
          %vm638 = vcmp.eq.s32.totalorder %v630, 1
          %vm639 = vcmp.eq.s32.totalorder %v631, 1
          %vm640 = vcmp.eq.s32.totalorder %v632, 1
          %vm641 = vcmp.eq.s32.totalorder %v633, 1
          %vm642 = vcmp.eq.s32.totalorder %v634, 1
          %vm643 = vcmp.eq.s32.totalorder %v635, 1
          %v644 = vsub.f32 0.0, %v618
          %v645 = vsub.f32 0.0, %v619
          %v646 = vsub.f32 0.0, %v620
          %v647 = vsub.f32 0.0, %v621
          %v648 = vsub.f32 0.0, %v622
          %v649 = vsub.f32 0.0, %v623
          %v650 = vsub.f32 0.0, %v624
          %v651 = vsub.f32 0.0, %v625
          %v652 = vmul.f32 %v644, 1.442695
          %v653 = vpow.pop %v652
          %v654 = vmul.f32 %v645, 1.442695
          %v655 = vpow.pop %v654
          %v656 = vmul.f32 %v646, 1.442695
          %v657 = vpow.pop %v656
          %v658 = vmul.f32 %v647, 1.442695
          %v659 = vpow.pop %v658
          %v660 = vmul.f32 %v648, 1.442695
          %v661 = vpow.pop %v660
          %v662 = vmul.f32 %v649, 1.442695
          %v663 = vpow.pop %v662
          %v664 = vmul.f32 %v650, 1.442695
          %v665 = vpow.pop %v664
          %v666 = vmul.f32 %v651, 1.442695
          %v667 = vpow.pop %v666
          %v668 = vadd.f32 %v653, 1.0
          %v669 = vadd.f32 %v655, 1.0
          %v670 = vadd.f32 %v657, 1.0
          %v671 = vadd.f32 %v659, 1.0
          %v672 = vadd.f32 %v661, 1.0
          %v673 = vadd.f32 %v663, 1.0
          %v674 = vadd.f32 %v665, 1.0
          %v675 = vadd.f32 %v667, 1.0
          %v676 = vrcp.pop %v668
          %v677 = vrcp.pop %v669
          %v678 = vrcp.pop %v670
          %v679 = vrcp.pop %v671
          %v680 = vrcp.pop %v672
          %v681 = vrcp.pop %v673
          %v682 = vrcp.pop %v674
          %v683 = vrcp.pop %v675
          %v684 = vmul.f32 %v653, 2.7182817
          %v685 = vmul.f32 %v655, 2.7182817
          %v686 = vmul.f32 %v657, 2.7182817
          %v687 = vmul.f32 %v659, 2.7182817
          %v688 = vmul.f32 %v661, 2.7182817
          %v689 = vmul.f32 %v663, 2.7182817
          %v690 = vmul.f32 %v665, 2.7182817
          %v691 = vmul.f32 %v667, 2.7182817
          %v692 = vadd.f32 %v684, 1.0
          %v693 = vadd.f32 %v685, 1.0
          %v694 = vadd.f32 %v686, 1.0
          %v695 = vadd.f32 %v687, 1.0
          %v696 = vadd.f32 %v688, 1.0
          %v697 = vadd.f32 %v689, 1.0
          %v698 = vadd.f32 %v690, 1.0
          %v699 = vadd.f32 %v691, 1.0
          %v700 = vrcp.pop %v692
          %v701 = vrcp.pop %v693
          %v702 = vrcp.pop %v694
          %v703 = vrcp.pop %v695
          %v704 = vrcp.pop %v696
          %v705 = vrcp.pop %v697
          %v706 = vrcp.pop %v698
          %v707 = vrcp.pop %v699
          %v708 = vmul.f32 %v653, 0.36787945
          %v709 = vmul.f32 %v655, 0.36787945
          %v710 = vmul.f32 %v657, 0.36787945
          %v711 = vmul.f32 %v659, 0.36787945
          %v712 = vmul.f32 %v661, 0.36787945
          %v713 = vmul.f32 %v663, 0.36787945
          %v714 = vmul.f32 %v665, 0.36787945
          %v715 = vmul.f32 %v667, 0.36787945
          %v716 = vadd.f32 %v708, 1.0
          %v717 = vadd.f32 %v709, 1.0
          %v718 = vadd.f32 %v710, 1.0
          %v719 = vadd.f32 %v711, 1.0
          %v720 = vadd.f32 %v712, 1.0
          %v721 = vadd.f32 %v713, 1.0
          %v722 = vadd.f32 %v714, 1.0
          %v723 = vadd.f32 %v715, 1.0
          %v724 = vrcp.pop %v716
          %v725 = vrcp.pop %v717
          %v726 = vrcp.pop %v718
          %v727 = vrcp.pop %v719
          %v728 = vrcp.pop %v720
          %v729 = vrcp.pop %v721
          %v730 = vrcp.pop %v722
          %v731 = vrcp.pop %v723
          %v732 = vsub.f32 1.0, %v700
          %v733 = vsub.f32 1.0, %v701
          %v734 = vsub.f32 1.0, %v702
          %v735 = vsub.f32 1.0, %v703
          %v736 = vsub.f32 1.0, %v704
          %v737 = vsub.f32 1.0, %v705
          %v738 = vsub.f32 1.0, %v706
          %v739 = vsub.f32 1.0, %v707
          %v740 = vmul.f32 %v676, %v732
          %v741 = vmul.f32 %v677, %v733
          %v742 = vmul.f32 %v678, %v734
          %v743 = vmul.f32 %v679, %v735
          %v744 = vmul.f32 %v680, %v736
          %v745 = vmul.f32 %v681, %v737
          %v746 = vmul.f32 %v682, %v738
          %v747 = vmul.f32 %v683, %v739
          %v748 = vsub.f32 1.0, %v676
          %v749 = vsub.f32 1.0, %v677
          %v750 = vsub.f32 1.0, %v678
          %v751 = vsub.f32 1.0, %v679
          %v752 = vsub.f32 1.0, %v680
          %v753 = vsub.f32 1.0, %v681
          %v754 = vsub.f32 1.0, %v682
          %v755 = vsub.f32 1.0, %v683
          %v756 = vmul.f32 %v724, %v748
          %v757 = vmul.f32 %v725, %v749
          %v758 = vmul.f32 %v726, %v750
          %v759 = vmul.f32 %v727, %v751
          %v760 = vmul.f32 %v728, %v752
          %v761 = vmul.f32 %v729, %v753
          %v762 = vmul.f32 %v730, %v754
          %v763 = vmul.f32 %v731, %v755
          %v764 = vlaneseq
          %v765 = vshrl.u32 %v764, 7
          %v766 = vadd.s32 %v765, 8
          %s767 = smul.u32 %s258, 16
          %s768 = sadd.s32 %s767, 0
          %v769 = vstv %s768
          %v770 = vadd.s32 %v769, %v765
          %v771 = vadd.s32 %v769, %v766
          %vm772 = vcmp.lt.s32.totalorder %v770, 4
          %vm773 = vcmp.lt.s32.totalorder %v771, 4
          %v774 = vsel %vm772, 1, 0
          %v775 = vsel %vm773, 1, 0
          %v777 = vunpack.c.l.s4 839922192
          %v778 = vunpack.c.0.s8 %v777
          %v779 = vlaneseq
          %v780 = vshrl.u32 %v779, 7
          %v781 = vsub.s32 %v778, %v780
          %v782 = vrot.slane %v774, %v781
          %v784 = vunpack.c.l.s4 1985246804
          %v785 = vunpack.c.0.s8 %v784
          %v786 = vlaneseq
          %v787 = vshrl.u32 %v786, 7
          %v788 = vsub.s32 %v785, %v787
          %v789 = vrot.slane %v774, %v788
          %v791 = vunpack.c.l.s4 839922192
          %v792 = vunpack.c.0.s8 %v791
          %v793 = vlaneseq
          %v794 = vshrl.u32 %v793, 7
          %v795 = vsub.s32 %v792, %v794
          %v796 = vrot.slane %v775, %v795
          %v798 = vunpack.c.l.s4 1985246804
          %v799 = vunpack.c.0.s8 %v798
          %v800 = vlaneseq
          %v801 = vshrl.u32 %v800, 7
          %v802 = vsub.s32 %v799, %v801
          %v803 = vrot.slane %v775, %v802
          %vm804 = vcmp.ne.s32.totalorder %v782, 0
          %vm805 = vcmp.ne.s32.totalorder %v789, 0
          %vm806 = vcmp.ne.s32.totalorder %v796, 0
          %vm807 = vcmp.ne.s32.totalorder %v803, 0
          %vm808 = vmand %vm636, %vm804
          %vm809 = vmand %vm637, %vm804
          %vm810 = vmand %vm638, %vm805
          %vm811 = vmand %vm639, %vm805
          %vm812 = vmand %vm640, %vm806
          %vm813 = vmand %vm641, %vm806
          %vm814 = vmand %vm642, %vm807
          %vm815 = vmand %vm643, %vm807
          %v824 = vcombine.low %v756, %v758
          %v825 = vcombine.high %v756, %v758
          %v826 = vcombine.low %v757, %v759
          %v827 = vcombine.low %v760, %v762
          %v828 = vcombine.high %v760, %v762
          %v829 = vcombine.low %v761, %v763
          %v836 = vsel %vm772, %v824, 0.0
          %v837 = vsel %vm772, %v825, 0.0
          %v838 = vsel %vm772, %v826, 0.0
          %v839 = vsel %vm773, %v827, 0.0
          %v840 = vsel %vm773, %v828, 0.0
          %v841 = vsel %vm773, %v829, 0.0
          %v842 = vld [vmem:[%s243] sm:$0xff]
          %v843 = vld [vmem:[%s243 + $0x8] sm:$0xff]
          %v844 = vld [vmem:[%s243 + $0x10] sm:$0xff]
          %v845 = vsel %vm808, %v740, 0.0
          %v846 = vsel %vm809, %v741, 0.0
          %v847 = vsel %vm810, %v742, 0.0
          %v848 = vsel %vm811, %v743, 0.0
          %v849 = vsel %vm812, %v744, 0.0
          %v850 = vsel %vm813, %v745, 0.0
          %v851 = vsel %vm814, %v746, 0.0
          %v852 = vsel %vm815, %v747, 0.0
          %v861 = vcombine.low %v845, %v847
          %v862 = vcombine.high %v845, %v847
          %v863 = vcombine.low %v846, %v848
          %v864 = vcombine.low %v849, %v851
          %v865 = vcombine.high %v849, %v851
          %v866 = vcombine.low %v850, %v852
          %v873 = vadd.f32 %v861, %v864
          %v874 = vadd.f32 %v862, %v865
          %vm875 = vcmask 359424
          %v876 = vsel %vm875, %v863, 0.0
          %v877 = vsel %vm875, %v866, 0.0
          %v878 = vadd.f32 %v876, %v877
          %v879 = vadd.f32 %v842, %v873
          %v880 = vadd.f32 %v843, %v874
          %v881 = vadd.f32 %v844, %v878
          %882 = vst [vmem:[%s243] sm:$0xff] %v879
          %883 = vst [vmem:[%s243 + $0x8] sm:$0xff] %v880
          %884 = vst.msk [vmem:[%s243 + $0x10] sm:$0xff] %vm875, %v881
          %s885 = scalar_lea.vmem %s243, 24 [#allocation7]
          %v886 = vld [vmem:[%s885] sm:$0xff]
          %v887 = vld [vmem:[%s885 + $0x8] sm:$0xff]
          %v888 = vld [vmem:[%s885 + $0x10] sm:$0xff]
          %v889 = vsel %vm808, %v756, 0.0
          %v890 = vsel %vm809, %v757, 0.0
          %v891 = vsel %vm810, %v758, 0.0
          %v892 = vsel %vm811, %v759, 0.0
          %v893 = vsel %vm812, %v760, 0.0
          %v894 = vsel %vm813, %v761, 0.0
          %v895 = vsel %vm814, %v762, 0.0
          %v896 = vsel %vm815, %v763, 0.0
          %v905 = vcombine.low %v889, %v891
          %v906 = vcombine.high %v889, %v891
          %v907 = vcombine.low %v890, %v892
          %v908 = vcombine.low %v893, %v895
          %v909 = vcombine.high %v893, %v895
          %v910 = vcombine.low %v894, %v896
          %v917 = vadd.f32 %v905, %v908
          %v918 = vadd.f32 %v906, %v909
          %v919 = vsel %vm875, %v907, 0.0
          %v920 = vsel %vm875, %v910, 0.0
          %v921 = vadd.f32 %v919, %v920
          %v922 = vadd.f32 %v886, %v917
          %v923 = vadd.f32 %v887, %v918
          %v924 = vadd.f32 %v888, %v921
          %925 = vst [vmem:[%s885] sm:$0xff] %v922
          %926 = vst [vmem:[%s885 + $0x8] sm:$0xff] %v923
          %927 = vst.msk [vmem:[%s885 + $0x10] sm:$0xff] %vm875, %v924
          %s928 = scalar_lea.vmem %s243, 48 [#allocation7]
          %v929 = vld [vmem:[%s928] sm:$0xff]
          %v930 = vld [vmem:[%s928 + $0x8] sm:$0xff]
          %v931 = vld [vmem:[%s928 + $0x10] sm:$0xff]
          %v932 = vadd.f32 %v836, %v839
          %v933 = vadd.f32 %v837, %v840
          %v934 = vsel %vm875, %v838, 0.0
          %v935 = vsel %vm875, %v841, 0.0
          %v936 = vadd.f32 %v934, %v935
          %v937 = vadd.f32 %v929, %v932
          %v938 = vadd.f32 %v930, %v933
          %v939 = vadd.f32 %v931, %v936
          %940 = vst [vmem:[%s928] sm:$0xff] %v937
          %941 = vst [vmem:[%s928 + $0x8] sm:$0xff] %v938
          %942 = vst.msk [vmem:[%s928 + $0x10] sm:$0xff] %vm875, %v939
          %s943 = scalar_lea.vmem %s243, 72 [#allocation7]
          %v944 = vld [vmem:[%s943] sm:$0xff]
          %v945 = vld [vmem:[%s943 + $0x8] sm:$0xff]
          %v946 = vld [vmem:[%s943 + $0x10] sm:$0xff]
          %v947 = vsel %vm808, 1.0, 0.0
          %v948 = vsel %vm809, 1.0, 0.0
          %v949 = vsel %vm810, 1.0, 0.0
          %v950 = vsel %vm811, 1.0, 0.0
          %v951 = vsel %vm812, 1.0, 0.0
          %v952 = vsel %vm813, 1.0, 0.0
          %v953 = vsel %vm814, 1.0, 0.0
          %v954 = vsel %vm815, 1.0, 0.0
          %v963 = vcombine.low %v947, %v949
          %v964 = vcombine.high %v947, %v949
          %v965 = vcombine.low %v948, %v950
          %v966 = vcombine.low %v951, %v953
          %v967 = vcombine.high %v951, %v953
          %v968 = vcombine.low %v952, %v954
          %v975 = vadd.f32 %v963, %v966
          %v976 = vadd.f32 %v964, %v967
          %v977 = vsel %vm875, %v965, 0.0
          %v978 = vsel %vm875, %v968, 0.0
          %v979 = vadd.f32 %v977, %v978
          %v980 = vadd.f32 %v944, %v975
          %v981 = vadd.f32 %v945, %v976
          %v982 = vadd.f32 %v946, %v979
          %983 = vst [vmem:[%s943] sm:$0xff] %v980
          %984 = vst [vmem:[%s943 + $0x8] sm:$0xff] %v981
          %985 = vst.msk [vmem:[%s943 + $0x10] sm:$0xff] %vm875, %v982
        $region48: #{tpu_custom_call.1} parent=27 // pred_fallthru
          _
        %s986 = sand.u32 %s106, 1
        %s987 = scalar_lea.sflag [#allocation4], %s986
        %s988 = sand.u32 %s106, 1
        %s989 = smul.addr %s988, 96
        %s990 = scalar_lea.vmem [#allocation7], %s989
        // Predicated region
        $region49: #{tpu_custom_call.1} parent=27 // pred_check
          %p991 = pneg %p116
        $region50: #{tpu_custom_call.1} parent=27 // pred_check_branch
          %993 = sbr.rel (%p991) target = $region52
        $region51: #{tpu_custom_call.1} parent=27 // pred_region
          %s995 = ssub.s32 1536, 1536
          %996 = vsyncadd %s987, %s995
          %s997 = smul.addr %s26, 12
          %s998 = smul.addr %s997, 128
          %s999 = scalar_lea.hbm %s2, %s998
          %s1000 = sshll.u32 %s990, 4
          %s1001 = int_to_ptr.vmem [resolvable:$true] %s1000
          %1006 = dma.vmem_to_hbm [thread:$0]  %s1001, 1536, %s999, %s987, 384, 384, 24
        $region52: #{tpu_custom_call.1} parent=27 // pred_fallthru
          _
      $region28: #{tpu_custom_call.1} parent=5 // pred_fallthru
        _
      %p1007 = scmp.le.s32.totalorder 2, %s17
      // Predicated region
      $region53: #{tpu_custom_call.1} parent=5 // pred_check
        %p1008 = pneg %p1007
      $region54: #{tpu_custom_call.1} parent=5 // pred_check_branch
        %1010 = sbr.rel (%p1008) target = $region56
      $region55: #{tpu_custom_call.1} parent=5 // pred_region
        %s1011 = ssub.s32 %s17, 2
        // Predicated region
        $region57: #{tpu_custom_call.1} parent=55 // pred_check
          %p1012 = pneg %p122
        $region58: #{tpu_custom_call.1} parent=55 // pred_check_branch
          %1014 = sbr.rel (%p1012) target = $region60
        $region59: #{tpu_custom_call.1} parent=55 // pred_region
          %s1015 = sand.u32 %s107, 1
          %s1016 = scalar_lea.sflag [#allocation4], %s1015
          %s1017 = sand.u32 %s107, 1
          %s1018 = smul.addr %s1017, 96
          %s1019 = scalar_lea.vmem [#allocation7], %s1018
          %1020 = dma.done %s1016, 1536
        $region60: #{tpu_custom_call.1} parent=55 // pred_fallthru
          _
      $region56: #{tpu_custom_call.1} parent=5 // pred_fallthru
        _
    $region6: #{tpu_custom_call.1} parent=1 // loop_footer
      %s21 = sadd.s32 1, %s17
    $region7: #{tpu_custom_call.1} parent=1 // loop_footer_branch
      %16 = sbr.rel target = $region3
    $region8: #{tpu_custom_call.1} parent=1 // loop_exit
      _
    %1021 = vsyncpa [#allocation3], 1
    %s1022 = scalar_lea.sflag [#allocation3], 1
    %1023 = vsyncpa %s1022, 1
    %1024 = vsyncpa [#allocation6], 1
    %s1025 = scalar_lea.sflag [#allocation6], 1
    %1026 = vsyncpa %s1025, 1
    %1027 = vsyncpa [#allocation4], 1
    %s1028 = scalar_lea.sflag [#allocation4], 1
    %1029 = vsyncpa %s1028, 1

</llo_original>
